<compile_context>
chip_gen: v7x
topology: tpu7x:2x2x1
jax: 0.10.0
libtpu: 0.0.40
codegen_flags: <defaults>
</compile_context>

<pallas_src>
import functools

import jax
import jax.numpy as jnp
from jax.experimental import pallas as pl
from jax.experimental.pallas import tpu as pltpu


def _dsc_kernel(x_ref, taps_ref, dwb_ref, wbd_ref, pwb_ref, out_ref, *, W, HW):
    """One grid step = Nb images.

    x_ref   : (Nb*C_in,  HW)          inputs, row = b*C_in + c, lanes = H*W
    taps_ref: (9, Nb*C_in, HW)        per-tap multiplier = dw weight x 0/1 mask
    dwb_ref : (Nb*C_in,  1)           depthwise bias (tiled per image)
    wbd_ref : (Nb*C_out, Nb*C_in)     block-diagonal pointwise weights
    pwb_ref : (Nb*C_out, 1)           pointwise bias (tiled per image)
    out_ref : (Nb*C_out, HW)          row = b*C_out + o
    """
    x = x_ref[...].astype(jnp.float32)                    # (R_in, HW)

    # --- depthwise 3x3: 1 center + 8 rolled taps; each tap = XLU roll + FMA ---
    acc = x * taps_ref[4]                                  # center tap (no roll)
    for dh in (-1, 0, 1):
        for dc in (-1, 0, 1):
            k = (dh + 1) * 3 + (dc + 1)
            if k == 4:
                continue
            s = dh * W + dc                                # static lane shift
            shifted = pltpu.roll(x, (-s) % HW, axis=1)     # shifted[p] = x[p+s]
            acc = acc + shifted * taps_ref[k]              # mask folded into tap
    acc = acc + dwb_ref[...]                               # depthwise bias

    # --- pointwise 1x1 for all Nb images: one lane-dense MXU matmul ---
    y = jnp.dot(wbd_ref[...], acc, preferred_element_type=jnp.float32)
    out_ref[...] = (y + pwb_ref[...]).astype(out_ref.dtype)


def _choose_nb(n, max_nb=8):
    """Images per grid step: largest divisor of n that is <= max_nb, preferring
    >= 2 grid blocks (keeps both v7x TensorCores busy) once the per-step batch
    is already >= 2 images."""
    divisors = [d for d in range(1, min(n, max_nb) + 1) if n % d == 0]
    best = divisors[-1]
    multi_block = [d for d in divisors if n // d >= 2]
    if multi_block and multi_block[-1] >= 2:
        best = multi_block[-1]
    return best


def depthwise_separable_conv(x_nchw, dw_w, dw_b, pw_w, pw_b, *, max_nb=8):
    """x_nchw: (N, C_in, H, W) float32.
    dw_w: (C_in, 1, 3, 3), dw_b: (C_in,)      -- torch depthwise conv params
    pw_w: (C_out, C_in, 1, 1), pw_b: (C_out,) -- torch pointwise conv params
    Returns (N, C_out, H, W), matching the PyTorch module."""
    N, C_in, H, W = x_nchw.shape
    C_out = pw_w.shape[0]
    HW = H * W
    Nb = _choose_nb(N, max_nb)
    G = N // Nb
    R_in, R_out = Nb * C_in, Nb * C_out

    # Free (contiguous) reshape: batch-major channel rows on sublanes, H*W on lanes.
    # NOTE: HW=256 here is already a multiple of 128 (lane-dense stores); general
    # H,W would want spatial padding / row tiling to keep the last dim % 128 == 0.
    x2 = x_nchw.reshape(G, R_in, HW)

    # ---- tiny precomputed operands (constant index_maps -> VMEM-resident) ----
    ri = jnp.arange(HW, dtype=jnp.int32) // W              # row of each lane
    ci = jnp.arange(HW, dtype=jnp.int32) % W                # col of each lane
    dww_rep = jnp.tile(dw_w.reshape(C_in, 9).astype(jnp.float32), (Nb, 1))
    planes = []
    for dh in (-1, 0, 1):
        for dc in (-1, 0, 1):
            k = (dh + 1) * 3 + (dc + 1)
            valid = ((ri + dh >= 0) & (ri + dh < H) &
                     (ci + dc >= 0) & (ci + dc < W)).astype(jnp.float32)
            planes.append(dww_rep[:, k][:, None] * valid[None, :])
    taps = jnp.stack(planes, axis=0)                        # (9, R_in, HW)

    dwb = jnp.tile(dw_b.reshape(C_in, 1).astype(jnp.float32), (Nb, 1))   # (R_in, 1)
    wbd = jnp.kron(jnp.eye(Nb, dtype=jnp.float32),
                   pw_w.reshape(C_out, C_in).astype(jnp.float32))        # (R_out, R_in)
    pwb = jnp.tile(pw_b.reshape(C_out, 1).astype(jnp.float32), (Nb, 1))  # (R_out, 1)

    kernel = functools.partial(_dsc_kernel, W=W, HW=HW)

    out2 = pl.pallas_call(
        kernel,
        out_shape=jax.ShapeDtypeStruct((G, R_out, HW), x_nchw.dtype),
        grid_spec=pltpu.PrefetchScalarGridSpec(
            num_scalar_prefetch=0,
            grid=(G,),
            in_specs=[
                pl.BlockSpec((pl.Squeezed(), R_in, HW), lambda g: (g, 0, 0)),
                # Constant block indices -> fetched once, resident across the grid.
                pl.BlockSpec((9, R_in, HW), lambda g: (0, 0, 0)),
                pl.BlockSpec((R_in, 1), lambda g: (0, 0)),
                pl.BlockSpec((R_out, R_in), lambda g: (0, 0)),
                pl.BlockSpec((R_out, 1), lambda g: (0, 0)),
            ],
            out_specs=pl.BlockSpec((pl.Squeezed(), R_out, HW),
                                   lambda g: (g, 0, 0)),
        ),
        compiler_params=pltpu.CompilerParams(
            dimension_semantics=("parallel",),
            vmem_limit_bytes=32 * 1024 * 1024,   # fits v7x's smaller VMEM too
        ),
    )(x2, taps, dwb, wbd, pwb)

    return out2.reshape(N, C_out, H, W)


def _reference(x_nchw, dw_w, dw_b, pw_w, pw_b):
    """Pure-JAX reference mirroring torch's Conv2d (NCHW)."""
    C_in = x_nchw.shape[1]
    dn = jax.lax.conv_dimension_numbers(x_nchw.shape, dw_w.shape,
                                        ("NCHW", "OIHW", "NCHW"))
    y = jax.lax.conv_general_dilated(
        x_nchw, dw_w, window_strides=(1, 1), padding=((1, 1), (1, 1)),
        dimension_numbers=dn, feature_group_count=C_in)
    y = y + dw_b[None, :, None, None]
    dn2 = jax.lax.conv_dimension_numbers(y.shape, pw_w.shape,
                                         ("NCHW", "OIHW", "NCHW"))
    z = jax.lax.conv_general_dilated(
        y, pw_w, window_strides=(1, 1), padding=((0, 0), (0, 0)),
        dimension_numbers=dn2)
    return z + pw_b[None, :, None, None]


if __name__ == "__main__":
    N, C_in, C_out, H, W = 2, 4, 8, 16, 16

    key = jax.random.PRNGKey(0)
    kx, k1, k2, k3, k4 = jax.random.split(key, 5)

    x = jax.random.normal(kx, (N, C_in, H, W), dtype=jnp.float32)
    # deterministic synthetic parameters (shapes match nn.Conv2d in __init__)
    dw_w = jax.random.normal(k1, (C_in, 1, 3, 3), dtype=jnp.float32) * 0.1
    dw_b = jax.random.normal(k2, (C_in,), dtype=jnp.float32) * 0.1
    pw_w = jax.random.normal(k3, (C_out, C_in, 1, 1), dtype=jnp.float32) * 0.1
    pw_b = jax.random.normal(k4, (C_out,), dtype=jnp.float32) * 0.1

    out = depthwise_separable_conv(x, dw_w, dw_b, pw_w, pw_b)
    out = jax.block_until_ready(out)

    ref = _reference(x, dw_w, dw_b, pw_w, pw_b)
    assert out.shape == (N, C_out, H, W)
    assert jnp.allclose(out, ref, atol=1e-4, rtol=1e-4), "mismatch vs reference"

    print("KERNEL_OK")
</pallas_src>

<mosaic_0001>
module attributes {stable_mosaic.version = 11 : i64} {
  func.func @_dsc_kernel(%arg0: i32, %arg1: memref<1x8x256xf32, #tpu.memory_space<vmem>>, %arg2: memref<9x8x256xf32, #tpu.memory_space<vmem>>, %arg3: memref<8x1xf32, #tpu.memory_space<vmem>>, %arg4: memref<16x8xf32, #tpu.memory_space<vmem>>, %arg5: memref<16x1xf32, #tpu.memory_space<vmem>>, %arg6: memref<1x16x256xf32, #tpu.memory_space<vmem>>) attributes {dimension_semantics = [#tpu.dimension_semantics<parallel>], iteration_bounds = array<i64: 1>, scalar_prefetch = 0 : i64, scratch_operands = 0 : i64, tpu.core_type = #tpu.core_type<tc>, window_params = [{transform_indices = @transform_0, window_bounds = array<i64: 1, 8, 256>}, {pipeline_mode = #tpu.pipeline_mode<synchronous>, transform_indices = @transform_1, window_bounds = array<i64: 9, 8, 256>}, {pipeline_mode = #tpu.pipeline_mode<synchronous>, transform_indices = @transform_2, window_bounds = array<i64: 8, 1>}, {pipeline_mode = #tpu.pipeline_mode<synchronous>, transform_indices = @transform_3, window_bounds = array<i64: 16, 8>}, {pipeline_mode = #tpu.pipeline_mode<synchronous>, transform_indices = @transform_4, window_bounds = array<i64: 16, 1>}, {transform_indices = @transform_5, window_bounds = array<i64: 1, 16, 256>}]} {
    %c0 = arith.constant 0 : index
    %c0_0 = arith.constant 0 : index
    %c0_1 = arith.constant 0 : index
    %0 = vector.load %arg1[%c0, %c0_0, %c0_1] : memref<1x8x256xf32, #tpu.memory_space<vmem>>, vector<1x8x256xf32>
    %1 = vector.shape_cast %0 : vector<1x8x256xf32> to vector<8x256xf32>
    %c4 = arith.constant 4 : index
    %c0_2 = arith.constant 0 : index
    %c0_3 = arith.constant 0 : index
    %2 = vector.load %arg2[%c4, %c0_2, %c0_3] : memref<9x8x256xf32, #tpu.memory_space<vmem>>, vector<1x8x256xf32>
    %3 = vector.shape_cast %2 : vector<1x8x256xf32> to vector<8x256xf32>
    %4 = arith.mulf %1, %3 : vector<8x256xf32>
    %c17_i32 = arith.constant 17 : i32
    %5 = tpu.dynamic_rotate %1 by %c17_i32 dim 1 : vector<8x256xf32>, i32 -> vector<8x256xf32>
    %c0_4 = arith.constant 0 : index
    %c0_5 = arith.constant 0 : index
    %c0_6 = arith.constant 0 : index
    %6 = vector.load %arg2[%c0_4, %c0_5, %c0_6] : memref<9x8x256xf32, #tpu.memory_space<vmem>>, vector<1x8x256xf32>
    %7 = vector.shape_cast %6 : vector<1x8x256xf32> to vector<8x256xf32>
    %8 = arith.mulf %5, %7 : vector<8x256xf32>
    %9 = arith.addf %4, %8 : vector<8x256xf32>
    %c16_i32 = arith.constant 16 : i32
    %10 = tpu.dynamic_rotate %1 by %c16_i32 dim 1 : vector<8x256xf32>, i32 -> vector<8x256xf32>
    %c1 = arith.constant 1 : index
    %c0_7 = arith.constant 0 : index
    %c0_8 = arith.constant 0 : index
    %11 = vector.load %arg2[%c1, %c0_7, %c0_8] : memref<9x8x256xf32, #tpu.memory_space<vmem>>, vector<1x8x256xf32>
    %12 = vector.shape_cast %11 : vector<1x8x256xf32> to vector<8x256xf32>
    %13 = arith.mulf %10, %12 : vector<8x256xf32>
    %14 = arith.addf %9, %13 : vector<8x256xf32>
    %c15_i32 = arith.constant 15 : i32
    %15 = tpu.dynamic_rotate %1 by %c15_i32 dim 1 : vector<8x256xf32>, i32 -> vector<8x256xf32>
    %c2 = arith.constant 2 : index
    %c0_9 = arith.constant 0 : index
    %c0_10 = arith.constant 0 : index
    %16 = vector.load %arg2[%c2, %c0_9, %c0_10] : memref<9x8x256xf32, #tpu.memory_space<vmem>>, vector<1x8x256xf32>
    %17 = vector.shape_cast %16 : vector<1x8x256xf32> to vector<8x256xf32>
    %18 = arith.mulf %15, %17 : vector<8x256xf32>
    %19 = arith.addf %14, %18 : vector<8x256xf32>
    %c1_i32 = arith.constant 1 : i32
    %20 = tpu.dynamic_rotate %1 by %c1_i32 dim 1 : vector<8x256xf32>, i32 -> vector<8x256xf32>
    %c3 = arith.constant 3 : index
    %c0_11 = arith.constant 0 : index
    %c0_12 = arith.constant 0 : index
    %21 = vector.load %arg2[%c3, %c0_11, %c0_12] : memref<9x8x256xf32, #tpu.memory_space<vmem>>, vector<1x8x256xf32>
    %22 = vector.shape_cast %21 : vector<1x8x256xf32> to vector<8x256xf32>
    %23 = arith.mulf %20, %22 : vector<8x256xf32>
    %24 = arith.addf %19, %23 : vector<8x256xf32>
    %c255_i32 = arith.constant 255 : i32
    %25 = tpu.dynamic_rotate %1 by %c255_i32 dim 1 : vector<8x256xf32>, i32 -> vector<8x256xf32>
    %c5 = arith.constant 5 : index
    %c0_13 = arith.constant 0 : index
    %c0_14 = arith.constant 0 : index
    %26 = vector.load %arg2[%c5, %c0_13, %c0_14] : memref<9x8x256xf32, #tpu.memory_space<vmem>>, vector<1x8x256xf32>
    %27 = vector.shape_cast %26 : vector<1x8x256xf32> to vector<8x256xf32>
    %28 = arith.mulf %25, %27 : vector<8x256xf32>
    %29 = arith.addf %24, %28 : vector<8x256xf32>
    %c241_i32 = arith.constant 241 : i32
    %30 = tpu.dynamic_rotate %1 by %c241_i32 dim 1 : vector<8x256xf32>, i32 -> vector<8x256xf32>
    %c6 = arith.constant 6 : index
    %c0_15 = arith.constant 0 : index
    %c0_16 = arith.constant 0 : index
    %31 = vector.load %arg2[%c6, %c0_15, %c0_16] : memref<9x8x256xf32, #tpu.memory_space<vmem>>, vector<1x8x256xf32>
    %32 = vector.shape_cast %31 : vector<1x8x256xf32> to vector<8x256xf32>
    %33 = arith.mulf %30, %32 : vector<8x256xf32>
    %34 = arith.addf %29, %33 : vector<8x256xf32>
    %c240_i32 = arith.constant 240 : i32
    %35 = tpu.dynamic_rotate %1 by %c240_i32 dim 1 : vector<8x256xf32>, i32 -> vector<8x256xf32>
    %c7 = arith.constant 7 : index
    %c0_17 = arith.constant 0 : index
    %c0_18 = arith.constant 0 : index
    %36 = vector.load %arg2[%c7, %c0_17, %c0_18] : memref<9x8x256xf32, #tpu.memory_space<vmem>>, vector<1x8x256xf32>
    %37 = vector.shape_cast %36 : vector<1x8x256xf32> to vector<8x256xf32>
    %38 = arith.mulf %35, %37 : vector<8x256xf32>
    %39 = arith.addf %34, %38 : vector<8x256xf32>
    %c239_i32 = arith.constant 239 : i32
    %40 = tpu.dynamic_rotate %1 by %c239_i32 dim 1 : vector<8x256xf32>, i32 -> vector<8x256xf32>
    %c8 = arith.constant 8 : index
    %c0_19 = arith.constant 0 : index
    %c0_20 = arith.constant 0 : index
    %41 = vector.load %arg2[%c8, %c0_19, %c0_20] : memref<9x8x256xf32, #tpu.memory_space<vmem>>, vector<1x8x256xf32>
    %42 = vector.shape_cast %41 : vector<1x8x256xf32> to vector<8x256xf32>
    %43 = arith.mulf %40, %42 : vector<8x256xf32>
    %44 = arith.addf %39, %43 : vector<8x256xf32>
    %c0_21 = arith.constant 0 : index
    %c0_22 = arith.constant 0 : index
    %45 = vector.load %arg3[%c0_21, %c0_22] : memref<8x1xf32, #tpu.memory_space<vmem>>, vector<8x1xf32>
    %46 = vector.broadcast %45 : vector<8x1xf32> to vector<8x256xf32>
    %47 = arith.addf %44, %46 : vector<8x256xf32>
    %c0_23 = arith.constant 0 : index
    %c0_24 = arith.constant 0 : index
    %48 = vector.load %arg4[%c0_23, %c0_24] : memref<16x8xf32, #tpu.memory_space<vmem>>, vector<16x8xf32>
    %cst = arith.constant dense<0.000000e+00> : vector<16x256xf32>
    %49 = tpu.matmul %48, %47, %cst {dimension_numbers = #tpu.dot_dimension_numbers<[1], [0], [0], [1], [0, 0, 1, 1], [], []>} : vector<16x8xf32>, vector<8x256xf32>, vector<16x256xf32> -> vector<16x256xf32>
    %c0_25 = arith.constant 0 : index
    %c0_26 = arith.constant 0 : index
    %50 = vector.load %arg5[%c0_25, %c0_26] : memref<16x1xf32, #tpu.memory_space<vmem>>, vector<16x1xf32>
    %51 = vector.broadcast %50 : vector<16x1xf32> to vector<16x256xf32>
    %52 = arith.addf %49, %51 : vector<16x256xf32>
    %c0_27 = arith.constant 0 : index
    %c0_28 = arith.constant 0 : index
    %c0_29 = arith.constant 0 : index
    %53 = vector.load %arg6[%c0_27, %c0_28, %c0_29] : memref<1x16x256xf32, #tpu.memory_space<vmem>>, vector<1x16x256xf32>
    %54 = vector.shape_cast %53 : vector<1x16x256xf32> to vector<16x256xf32>
    %55 = vector.shape_cast %52 : vector<16x256xf32> to vector<1x16x256xf32>
    tpu.vector_store %arg6[%c0_27, %c0_28, %c0_29], %55 {strides = array<i32>} : memref<1x16x256xf32, #tpu.memory_space<vmem>>, vector<1x16x256xf32>,
    return
  }
  func.func @transform_0(%arg0: i32) -> (i32, i32, i32) {
    %c0_i32 = arith.constant 0 : i32
    %c0_i32_0 = arith.constant 0 : i32
    %c0_i32_1 = arith.constant 0 : i32
    return %arg0, %c0_i32, %c0_i32_0 : i32, i32, i32
  }
  func.func @transform_1(%arg0: i32) -> (i32, i32, i32) {
    %c0_i32 = arith.constant 0 : i32
    %c0_i32_0 = arith.constant 0 : i32
    %c0_i32_1 = arith.constant 0 : i32
    %c0_i32_2 = arith.constant 0 : i32
    return %c0_i32, %c0_i32_0, %c0_i32_1 : i32, i32, i32
  }
  func.func @transform_2(%arg0: i32) -> (i32, i32) {
    %c0_i32 = arith.constant 0 : i32
    %c0_i32_0 = arith.constant 0 : i32
    %c0_i32_1 = arith.constant 0 : i32
    return %c0_i32, %c0_i32_0 : i32, i32
  }
  func.func @transform_3(%arg0: i32) -> (i32, i32) {
    %c0_i32 = arith.constant 0 : i32
    %c0_i32_0 = arith.constant 0 : i32
    %c0_i32_1 = arith.constant 0 : i32
    return %c0_i32, %c0_i32_0 : i32, i32
  }
  func.func @transform_4(%arg0: i32) -> (i32, i32) {
    %c0_i32 = arith.constant 0 : i32
    %c0_i32_0 = arith.constant 0 : i32
    %c0_i32_1 = arith.constant 0 : i32
    return %c0_i32, %c0_i32_0 : i32, i32
  }
  func.func @transform_5(%arg0: i32) -> (i32, i32, i32) {
    %c0_i32 = arith.constant 0 : i32
    %c0_i32_0 = arith.constant 0 : i32
    %c0_i32_1 = arith.constant 0 : i32
    return %arg0, %c0_i32, %c0_i32_0 : i32, i32, i32
  }
}

</mosaic_0001>

<llo_original>
// kernel: tpu_custom_call.1
$region0: #{tpu_custom_call.1}
  #allocation0 [shape = 'u32[]', space=smem, size = 0x4, offset = 0x4, fixed_abs, tag = 'smem constant byte address 0x4 - core index']
  #allocation1 [shape = 'u32[144,128]{1,0:T(1,128)}', space=vmem, size = 0x12000, scoped, tag = 'internal scratch']
  %s0 = inlined_call_operand.vmem [shape: f32[1,8,256], index: 0, kind: input, shape index: {}]
  %s1 = inlined_call_operand.hbm [shape: f32[9,8,256], index: 1, kind: input, shape index: {}]
  %s2 = inlined_call_operand.vmem [shape: f32[8,1], index: 2, kind: input, shape index: {}]
  %s3 = inlined_call_operand.vmem [shape: f32[16,8], index: 3, kind: input, shape index: {}]
  %s4 = inlined_call_operand.vmem [shape: f32[16,1], index: 4, kind: input, shape index: {}]
  %s5 = inlined_call_operand.hbm [shape: f32[1,16,256], index: 5, kind: output, shape index: {}]
  %s6 = sld [smem:[#allocation0]]
  $region34: #{tpu_custom_call.1} parent=0
    _
  %s8 = ssub.s32 1, %s6
  %s9 = scalar_select 0, %s8, %s6
  $region1: #{tpu_custom_call.1} parent=0
    #allocation2 [shape = 'u8[73728]{0}', space=vmem, size = 0x12000, scoped, tag = 'input window, operand 1, single buffered']
    #allocation3 [shape = 's32[1]{0}', space=sflag, size = 0x4, scoped, tag = 'scoped memory for tpu_custom_call.1']
    #allocation4 [shape = 's32[1]{0}', space=sflag, size = 0x4, scoped, tag = 'scoped memory for tpu_custom_call.1']
    #allocation5 [shape = 'u8[16384]{0}', space=vmem, size = 0x4000, scoped, tag = 'output window, operand 0, single buffered']
    %10 = vsyncpa [#allocation3], 0
    %11 = vsyncpa [#allocation4], 0
    // Predicated region
    $region2: #{tpu_custom_call.1} parent=1 // pred_check
      _
    $region3: #{tpu_custom_call.1} parent=1 // pred_check_branch
      %13 = sbr.rel (0) target = $region5
    $region4: #{tpu_custom_call.1} parent=1 // pred_region
      _
    $region5: #{tpu_custom_call.1} parent=1 // pred_fallthru
      _
    // Predicated region
    $region6: #{tpu_custom_call.1} parent=1 // pred_check
      _
    $region7: #{tpu_custom_call.1} parent=1 // pred_check_branch
      %15 = sbr.rel (0) target = $region9
    $region8: #{tpu_custom_call.1} parent=1 // pred_region
      %s17 = ssub.s32 2304, 2304
      %18 = vsyncadd [#allocation3], %s17
      %s19 = sshll.u32 [#allocation2], 4
      %s20 = int_to_ptr.vmem [resolvable:$true] %s19
      %25 = dma.hbm_to_vmem [thread:$0]  %s1, 2304, %s20, [#allocation3], 256, 256, 16
    $region9: #{tpu_custom_call.1} parent=1 // pred_fallthru
      _
    // Predicated region
    $region10: #{tpu_custom_call.1} parent=1 // pred_check
      _
    $region11: #{tpu_custom_call.1} parent=1 // pred_check_branch
      %27 = sbr.rel (0) target = $region13
    $region12: #{tpu_custom_call.1} parent=1 // pred_region
      _
    $region13: #{tpu_custom_call.1} parent=1 // pred_fallthru
      _
    // Predicated region
    $region14: #{tpu_custom_call.1} parent=1 // pred_check
      _
    $region15: #{tpu_custom_call.1} parent=1 // pred_check_branch
      %29 = sbr.rel (0) target = $region17
    $region16: #{tpu_custom_call.1} parent=1 // pred_region
      _
    $region17: #{tpu_custom_call.1} parent=1 // pred_fallthru
      _
    // Predicated region
    $region18: #{tpu_custom_call.1} parent=1 // pred_check
      _
    $region19: #{tpu_custom_call.1} parent=1 // pred_check_branch
      %31 = sbr.rel (0) target = $region21
    $region20: #{tpu_custom_call.1} parent=1 // pred_region
      _
    $region21: #{tpu_custom_call.1} parent=1 // pred_fallthru
      _
    // Predicated region
    $region22: #{tpu_custom_call.1} parent=1 // pred_check
      _
    $region23: #{tpu_custom_call.1} parent=1 // pred_check_branch
      %33 = sbr.rel (0) target = $region25
    $region24: #{tpu_custom_call.1} parent=1 // pred_region
      %34 = dma.done [#allocation3], 2304
    $region25: #{tpu_custom_call.1} parent=1 // pred_fallthru
      _
    %v35 = vld [vmem:[%s0] sm:$0xff]
    %v36 = vld [vmem:[%s0 + $0x8] sm:$0xff]
    %s37 = scalar_lea.vmem [#allocation2], 64
    %v38 = vld [vmem:[%s37] sm:$0xff]
    %v39 = vld [vmem:[%s37 + $0x8] sm:$0xff]
    %v40 = vmul.f32 %v35, %v38
    %v41 = vmul.f32 %v36, %v39
    %42 = vrot.lane.b32.xlu0 %v35, 17
    %v43 = vpop.permute.xlu0 %42
    %44 = vrot.lane.b32.xlu0 %v36, 17
    %v45 = vpop.permute.xlu0 %44
    %v46 = vlaneseq
    %v47 = vand.u32 %v46, 127
    %vm48 = vcmp.lt.s32.totalorder %v47, 17
    %v49 = vsel %vm48, %v43, %v45
    %v50 = vsel %vm48, %v45, %v43
    %v51 = vld [vmem:[#allocation2] sm:$0xff]
    %v52 = vld [vmem:[#allocation2 + $0x8] sm:$0xff]
    %v53 = vmul.f32 %v50, %v51
    %v54 = vmul.f32 %v49, %v52
    %v55 = vadd.f32 %v40, %v53
    %v56 = vadd.f32 %v41, %v54
    %57 = vrot.lane.b32.xlu0 %v35, 16
    %v58 = vpop.permute.xlu0 %57
    %59 = vrot.lane.b32.xlu0 %v36, 16
    %v60 = vpop.permute.xlu0 %59
    %vm61 = vcmp.lt.s32.totalorder %v47, 16
    %v62 = vsel %vm61, %v58, %v60
    %v63 = vsel %vm61, %v60, %v58
    %s64 = scalar_lea.vmem [#allocation2], 16
    %v65 = vld [vmem:[%s64] sm:$0xff]
    %v66 = vld [vmem:[%s64 + $0x8] sm:$0xff]
    %v67 = vmul.f32 %v63, %v65
    %v68 = vmul.f32 %v62, %v66
    %v69 = vadd.f32 %v55, %v67
    %v70 = vadd.f32 %v56, %v68
    %71 = vrot.lane.b32.xlu0 %v35, 15
    %v72 = vpop.permute.xlu0 %71
    %73 = vrot.lane.b32.xlu0 %v36, 15
    %v74 = vpop.permute.xlu0 %73
    %vm75 = vcmp.lt.s32.totalorder %v47, 15
    %v76 = vsel %vm75, %v72, %v74
    %v77 = vsel %vm75, %v74, %v72
    %s78 = scalar_lea.vmem [#allocation2], 32
    %v79 = vld [vmem:[%s78] sm:$0xff]
    %v80 = vld [vmem:[%s78 + $0x8] sm:$0xff]
    %v81 = vmul.f32 %v77, %v79
    %v82 = vmul.f32 %v76, %v80
    %v83 = vadd.f32 %v69, %v81
    %v84 = vadd.f32 %v70, %v82
    %85 = vrot.lane.b32.xlu0 %v35, 1
    %v86 = vpop.permute.xlu0 %85
    %87 = vrot.lane.b32.xlu0 %v36, 1
    %v88 = vpop.permute.xlu0 %87
    %vm89 = vcmp.lt.s32.totalorder %v47, 1
    %v90 = vsel %vm89, %v86, %v88
    %v91 = vsel %vm89, %v88, %v86
    %s92 = scalar_lea.vmem [#allocation2], 48
    %v93 = vld [vmem:[%s92] sm:$0xff]
    %v94 = vld [vmem:[%s92 + $0x8] sm:$0xff]
    %v95 = vmul.f32 %v91, %v93
    %v96 = vmul.f32 %v90, %v94
    %v97 = vadd.f32 %v83, %v95
    %v98 = vadd.f32 %v84, %v96
    %99 = vrot.lane.b32.xlu0 %v35, 127
    %v100 = vpop.permute.xlu0 %99
    %101 = vrot.lane.b32.xlu0 %v36, 127
    %v102 = vpop.permute.xlu0 %101
    %vm103 = vcmp.lt.s32.totalorder %v47, 127
    %v104 = vsel %vm103, %v100, %v102
    %v105 = vsel %vm103, %v102, %v100
    %s106 = scalar_lea.vmem [#allocation2], 80
    %v107 = vld [vmem:[%s106] sm:$0xff]
    %v108 = vld [vmem:[%s106 + $0x8] sm:$0xff]
    %v109 = vmul.f32 %v104, %v107
    %v110 = vmul.f32 %v105, %v108
    %v111 = vadd.f32 %v97, %v109
    %v112 = vadd.f32 %v98, %v110
    %113 = vrot.lane.b32.xlu0 %v35, 113
    %v114 = vpop.permute.xlu0 %113
    %115 = vrot.lane.b32.xlu0 %v36, 113
    %v116 = vpop.permute.xlu0 %115
    %vm117 = vcmp.lt.s32.totalorder %v47, 113
    %v118 = vsel %vm117, %v114, %v116
    %v119 = vsel %vm117, %v116, %v114
    %s120 = scalar_lea.vmem [#allocation2], 96
    %v121 = vld [vmem:[%s120] sm:$0xff]
    %v122 = vld [vmem:[%s120 + $0x8] sm:$0xff]
    %v123 = vmul.f32 %v118, %v121
    %v124 = vmul.f32 %v119, %v122
    %v125 = vadd.f32 %v111, %v123
    %v126 = vadd.f32 %v112, %v124
    %127 = vrot.lane.b32.xlu0 %v35, 112
    %v128 = vpop.permute.xlu0 %127
    %129 = vrot.lane.b32.xlu0 %v36, 112
    %v130 = vpop.permute.xlu0 %129
    %vm131 = vcmp.lt.s32.totalorder %v47, 112
    %v132 = vsel %vm131, %v128, %v130
    %v133 = vsel %vm131, %v130, %v128
    %s134 = scalar_lea.vmem [#allocation2], 112
    %v135 = vld [vmem:[%s134] sm:$0xff]
    %v136 = vld [vmem:[%s134 + $0x8] sm:$0xff]
    %v137 = vmul.f32 %v132, %v135
    %v138 = vmul.f32 %v133, %v136
    %v139 = vadd.f32 %v125, %v137
    %v140 = vadd.f32 %v126, %v138
    %141 = vrot.lane.b32.xlu0 %v35, 111
    %v142 = vpop.permute.xlu0 %141
    %143 = vrot.lane.b32.xlu0 %v36, 111
    %v144 = vpop.permute.xlu0 %143
    %vm145 = vcmp.lt.s32.totalorder %v47, 111
    %v146 = vsel %vm145, %v142, %v144
    %v147 = vsel %vm145, %v144, %v142
    %s148 = scalar_lea.vmem [#allocation2], 128
    %v149 = vld [vmem:[%s148] sm:$0xff]
    %v150 = vld [vmem:[%s148 + $0x8] sm:$0xff]
    %v151 = vmul.f32 %v146, %v149
    %v152 = vmul.f32 %v147, %v150
    %v153 = vadd.f32 %v139, %v151
    %v154 = vadd.f32 %v140, %v152
    %v155 = vld [vmem:[%s2] sm:$0xff]
    %157 = vset.pattern.permute.xlu0 0
    %158 = vperm.xlu0 %157, %v155
    %v159 = vpop.permute.xlu0 %158
    %v161 = vadd.f32 %v153, %v159
    %v162 = vadd.f32 %v154, %v159
    %v163 = vld [vmem:[%s3] sm:$0xff]
    %v164 = vld [vmem:[%s3 + $0x8] sm:$0xff]
    %v165 = vld [vmem:[%s4] sm:$0xff]
    %v166 = vld [vmem:[%s4 + $0x8] sm:$0xff]
    %168 = vset.pattern.permute.xlu0 0
    %169 = vperm.xlu0 %168, %v165
    %v170 = vpop.permute.xlu0 %169
    %173 = vset.pattern.permute.xlu0 0
    %174 = vperm.xlu0 %173, %v166
    %v175 = vpop.permute.xlu0 %174
    %vm177 = vcmask 64512
    %v179 = vsel %vm177, %v163, 0
    %v182 = vsel %vm177, %v164, 0
    %184 = vmatprep.subr.mxu0 %v162
    %185 = vmatpush1.msra.mxu0 %v161
    %186 = vmatprep.subr.mxu0 0.0
    %187 = vmatpush1.msra.mxu0 0.0
    %188 = vmatprep.subr.mxu0 0.0
    %189 = vmatpush1.msra.mxu0 0.0
    %190 = vmatprep.subr.mxu0 0.0
    %191 = vmatpush1.msra.mxu0 0.0
    %192 = vmatprep.subr.mxu0 0.0
    %193 = vmatpush1.msra.mxu0 0.0
    %194 = vmatprep.subr.mxu0 0.0
    %195 = vmatpush1.msra.mxu0 0.0
    %196 = vmatprep.subr.mxu0 0.0
    %197 = vmatpush1.msra.mxu0 0.0
    %198 = vmatprep.subr.mxu0 0.0
    %199 = vmatpush1.msra.mxu0 0.0
    %200 = vmatprep.subr.mxu0 0.0
    %201 = vmatpush1.msra.mxu0 0.0
    %202 = vmatprep.subr.mxu0 0.0
    %203 = vmatpush1.msra.mxu0 0.0
    %204 = vmatprep.subr.mxu0 0.0
    %205 = vmatpush1.msra.mxu0 0.0
    %206 = vmatprep.subr.mxu0 0.0
    %207 = vmatpush1.msra.mxu0 0.0
    %208 = vmatprep.subr.mxu0 0.0
    %209 = vmatpush1.msra.mxu0 0.0
    %210 = vmatprep.subr.mxu0 0.0
    %211 = vmatpush1.msra.mxu0 0.0
    %212 = vmatprep.subr.mxu0 0.0
    %213 = vmatpush1.msra.mxu0 0.0
    %214 = vmatprep.subr.mxu0 0.0
    %215 = vmatpush1.msra.mxu0 0.0
    %216 = vmatprep.subr.mxu0 0.0
    %217 = vmatpush1.msra.mxu0 0.0
    %218 = vmatprep.subr.mxu0 0.0
    %219 = vmatpush1.msra.mxu0 0.0
    %220 = vmatprep.subr.mxu0 0.0
    %221 = vmatpush1.msra.mxu0 0.0
    %222 = vmatprep.subr.mxu0 0.0
    %223 = vmatpush1.msra.mxu0 0.0
    %224 = vmatprep.subr.mxu0 0.0
    %225 = vmatpush1.msra.mxu0 0.0
    %226 = vmatprep.subr.mxu0 0.0
    %227 = vmatpush1.msra.mxu0 0.0
    %228 = vmatprep.subr.mxu0 0.0
    %229 = vmatpush1.msra.mxu0 0.0
    %230 = vmatprep.subr.mxu0 0.0
    %231 = vmatpush1.msra.mxu0 0.0
    %232 = vmatprep.subr.mxu0 0.0
    %233 = vmatpush1.msra.mxu0 0.0
    %234 = vmatprep.subr.mxu0 0.0
    %235 = vmatpush1.msra.mxu0 0.0
    %236 = vmatprep.subr.mxu0 0.0
    %237 = vmatpush1.msra.mxu0 0.0
    %238 = vmatprep.subr.mxu0 0.0
    %239 = vmatpush1.msra.mxu0 0.0
    %240 = vmatprep.subr.mxu0 0.0
    %241 = vmatpush1.msra.mxu0 0.0
    %242 = vmatprep.subr.mxu0 0.0
    %243 = vmatpush1.msra.mxu0 0.0
    %244 = vmatprep.subr.mxu0 0.0
    %245 = vmatpush1.msra.mxu0 0.0
    %246 = vmatprep.subr.mxu0 0.0
    %247 = vmatpush1.msra.mxu0 0.0
    %248 = vmatprep.mubr.f32.mxu0 0.0
    %249 = vmatmul.mubr.f32.gmra.mrb[0].mxu0 %v179
    %v250 = vpop.f32.mrb[0].mxu0
    %v251 = vadd.f32 %v170, %v250
    %v252 = vpop.f32.mrb[0].mxu0
    %v253 = vadd.f32 %v170, %v252
    %254 = vmatprep.mubr.f32.mxu0 0.0
    %255 = vmatmul.mubr.f32.gmra.mrb[0].mxu0 %v182
    %v256 = vpop.f32.mrb[0].mxu0
    %v257 = vadd.f32 %v175, %v256
    %v258 = vpop.f32.mrb[0].mxu0
    %v259 = vadd.f32 %v175, %v258
    %260 = vdwg.mxu0
    %261 = vst [vmem:[#allocation5] sm:$0xff] %v251
    %262 = vst [vmem:[#allocation5 + $0x8] sm:$0xff] %v253
    %263 = vst [vmem:[#allocation5 + $0x10] sm:$0xff] %v257
    %264 = vst [vmem:[#allocation5 + $0x18] sm:$0xff] %v259
    // Predicated region
    $region26: #{tpu_custom_call.1} parent=1 // pred_check
      _
    $region27: #{tpu_custom_call.1} parent=1 // pred_check_branch
      %266 = sbr.rel (0) target = $region29
    $region28: #{tpu_custom_call.1} parent=1 // pred_region
      %s268 = ssub.s32 512, 512
      %269 = vsyncadd [#allocation4], %s268
      %s270 = sshll.u32 [#allocation5], 4
      %s271 = int_to_ptr.vmem [resolvable:$true] %s270
      %276 = dma.vmem_to_hbm [thread:$0]  %s271, 512, %s5, [#allocation4], 256, 256, 16
    $region29: #{tpu_custom_call.1} parent=1 // pred_fallthru
      _
    // Predicated region
    $region30: #{tpu_custom_call.1} parent=1 // pred_check
      _
    $region31: #{tpu_custom_call.1} parent=1 // pred_check_branch
      %278 = sbr.rel (0) target = $region33
    $region32: #{tpu_custom_call.1} parent=1 // pred_region
      %279 = dma.done [#allocation4], 512
    $region33: #{tpu_custom_call.1} parent=1 // pred_fallthru
      _
    %280 = vsyncpa [#allocation3], 1
    %281 = vsyncpa [#allocation4], 1

</llo_original>
